<compile_context>
chip_gen: v7x
topology: tpu7x:2x2x1
jax: 0.10.0
libtpu: 0.0.40
codegen_flags: <defaults>
</compile_context>

<pallas_src>
import math

import jax
import jax.numpy as jnp
from jax import lax
from jax.experimental import pallas as pl
from jax.experimental.pallas import tpu as pltpu

L2_EPS = 1e-12            # F.normalize default eps
_EPS_SQ = L2_EPS * L2_EPS


def _arc_margin_kernel(f_ref, w_ref, o_ref, acc_ref, fss_ref, wss_ref):
    """Grid = (batch tiles, class tiles, K tiles); K is the reduction ("arbitrary") axis.

    f_ref : (bb, bk) feature tile (native dtype)
    w_ref : (bn, bk) weight-row tile (native dtype)
    o_ref : (bb, bn) cosine output tile
    acc_ref : (bb, bn) f32  raw f @ w.T accumulator
    fss_ref : (bb, 1)  f32  sum(f^2) accumulator (per batch row)
    wss_ref : (bn, 1)  f32  sum(w^2) accumulator (per class row)
    """
    k = pl.program_id(2)
    nk = pl.num_programs(2)

    @pl.when(k == 0)
    def _():
        acc_ref[...] = jnp.zeros_like(acc_ref)
        fss_ref[...] = jnp.zeros_like(fss_ref)
        wss_ref[...] = jnp.zeros_like(wss_ref)

    f = f_ref[...]
    w = w_ref[...]

    # Raw (un-normalized) matmul on the MXU, f32 accumulation. bf16 operands stay bf16.
    acc_ref[...] += lax.dot_general(
        f, w,
        dimension_numbers=(((1,), (1,)), ((), ())),
        preferred_element_type=jnp.float32)

    # Sum-of-squares partials in f32 (normalization applied post-matmul).
    f32 = f.astype(jnp.float32)
    w32 = w.astype(jnp.float32)
    fss_ref[...] += jnp.sum(f32 * f32, axis=-1, keepdims=True)
    wss_ref[...] += jnp.sum(w32 * w32, axis=-1, keepdims=True)

    @pl.when(k == nk - 1)
    def _():
        # F.normalize: x / max(||x||, eps) == x * rsqrt(max(sum(x^2), eps^2))
        inv_f = lax.rsqrt(jnp.maximum(fss_ref[...], _EPS_SQ))   # (bb, 1)
        inv_w = lax.rsqrt(jnp.maximum(wss_ref[...], _EPS_SQ))   # (bn, 1)
        o_ref[...] = (acc_ref[...] * inv_f * inv_w.T).astype(o_ref.dtype)


def _round_up(x, m):
    return -(-x // m) * m


def _pad2d(x, rows, cols):
    r, c = x.shape
    if r == rows and c == cols:
        return x
    return jnp.pad(x, ((0, rows - r), (0, cols - c)))


def arc_margin_product(features, weight):
    """cosine = F.linear(F.normalize(features), F.normalize(weight)).

    features: (B, in_features)   weight: (out_features, in_features)
    returns:  (B, out_features)
    """
    B, K = features.shape
    N, K2 = weight.shape
    assert K == K2, (features.shape, weight.shape)
    out_dtype = jnp.result_type(features.dtype, weight.dtype)

    # ---- batch tiling ------------------------------------------------------------
    if B <= 256:
        block_b, b_pad = B, B                 # full-dim block (legal even if B % 8 != 0)
    else:
        block_b = 256                          # fills MXU rows at training batch sizes
        b_pad = _round_up(B, block_b)

    # ---- class (out_features) tiling: lane-dense, >=2 tiles for v7x megacore ------
    if N <= 128:
        block_n, n_pad = N, N
    elif N < 1024:
        block_n = 128                          # keeps >=2 parallel N tiles
        n_pad = _round_up(N, block_n)
    else:
        block_n = 512                          # large lane-dense tiles, still >=2 steps
        n_pad = _round_up(N, block_n)

    # ---- in_features tiling: only add a K reduction axis when K is large ----------
    if K <= 2048:
        block_k, k_pad = K, K
    else:
        block_k = 1024                         # keeps weight tile << VMEM on v7x
        k_pad = _round_up(K, block_k)

    f_p = _pad2d(features, b_pad, k_pad)       # zero padding is norm/dot-neutral
    w_p = _pad2d(weight, n_pad, k_pad)

    grid = (b_pad // block_b, n_pad // block_n, k_pad // block_k)

    out = pl.pallas_call(
        _arc_margin_kernel,
        out_shape=jax.ShapeDtypeStruct((b_pad, n_pad), out_dtype),
        grid=grid,
        in_specs=[
            pl.BlockSpec((block_b, block_k), lambda b, n, k: (b, k)),   # features
            pl.BlockSpec((block_n, block_k), lambda b, n, k: (n, k)),   # weight rows
        ],
        out_specs=pl.BlockSpec((block_b, block_n), lambda b, n, k: (b, n)),
        scratch_shapes=[
            pltpu.VMEM((block_b, block_n), jnp.float32),   # raw dot accumulator
            pltpu.VMEM((block_b, 1), jnp.float32),         # feature sum-of-squares
            pltpu.VMEM((block_n, 1), jnp.float32),         # weight-row sum-of-squares
        ],
        compiler_params=pltpu.CompilerParams(
            dimension_semantics=("parallel", "parallel", "arbitrary")),
    )(f_p, w_p)

    if (b_pad, n_pad) != (B, N):
        out = out[:B, :N]
    return out


if __name__ == "__main__":
    key = jax.random.PRNGKey(0)
    kf, kw = jax.random.split(key)

    # Small shapes consistent with the module: features (B, in), weight (out, in).
    B, IN_FEATURES, OUT_FEATURES = 8, 128, 256
    features = jax.random.normal(kf, (B, IN_FEATURES), jnp.float32)
    # xavier_uniform_ equivalent: U(-a, a), a = sqrt(6 / (fan_in + fan_out))
    limit = math.sqrt(6.0 / (IN_FEATURES + OUT_FEATURES))
    weight = jax.random.uniform(kw, (OUT_FEATURES, IN_FEATURES), jnp.float32,
                                minval=-limit, maxval=limit)

    cosine = jax.block_until_ready(jax.jit(arc_margin_product)(features, weight))

    # Pure-JAX reference of the PyTorch module
    def ref(f, w):
        fn = f / jnp.maximum(jnp.linalg.norm(f, axis=1, keepdims=True), L2_EPS)
        wn = w / jnp.maximum(jnp.linalg.norm(w, axis=1, keepdims=True), L2_EPS)
        return fn @ wn.T

    expected = ref(features, weight)
    assert cosine.shape == (B, OUT_FEATURES), cosine.shape
    assert bool(jnp.all(jnp.isfinite(cosine)))
    assert bool(jnp.allclose(cosine, expected, atol=1e-5, rtol=1e-5))
    assert bool(jnp.all(jnp.abs(cosine) <= 1.0 + 1e-5))   # cosines are bounded
    print("KERNEL_OK")
</pallas_src>

<mosaic_0001>
module attributes {stable_mosaic.version = 11 : i64} {
  func.func @_arc_margin_kernel(%arg0: i32, %arg1: i32, %arg2: i32, %arg3: memref<8x128xf32, #tpu.memory_space<vmem>>, %arg4: memref<128x128xf32, #tpu.memory_space<vmem>>, %arg5: memref<8x128xf32, #tpu.memory_space<vmem>>, %arg6: memref<8x128xf32, #tpu.memory_space<vmem>>, %arg7: memref<8x1xf32, #tpu.memory_space<vmem>>, %arg8: memref<128x1xf32, #tpu.memory_space<vmem>>) attributes {dimension_semantics = [#tpu.dimension_semantics<parallel>, #tpu.dimension_semantics<parallel>, #tpu.dimension_semantics<arbitrary>], iteration_bounds = array<i64: 1, 2, 1>, scalar_prefetch = 0 : i64, scratch_operands = 3 : i64, tpu.core_type = #tpu.core_type<tc>, window_params = [{transform_indices = @transform_0, window_bounds = array<i64: 8, 128>}, {transform_indices = @transform_1, window_bounds = array<i64: 128, 128>}, {transform_indices = @transform_2, window_bounds = array<i64: 8, 128>}]} {
    %c0_i32 = arith.constant 0 : i32
    %0 = arith.cmpi eq, %arg2, %c0_i32 : i32
    %1 = arith.extui %0 : i1 to i32
    %c0_i32_0 = arith.constant 0 : i32
    %2 = arith.cmpi ne, %1, %c0_i32_0 : i32
    scf.if %2 {
      %cst_20 = arith.constant 0.000000e+00 : f32
      %24 = vector.broadcast %cst_20 : f32 to vector<8x128xf32>
      %c0_21 = arith.constant 0 : index
      %c0_22 = arith.constant 0 : index
      %25 = vector.load %arg6[%c0_21, %c0_22] : memref<8x128xf32, #tpu.memory_space<vmem>>, vector<8x128xf32>
      tpu.vector_store %arg6[%c0_21, %c0_22], %24 {strides = array<i32>} : memref<8x128xf32, #tpu.memory_space<vmem>>, vector<8x128xf32>,
      %cst_23 = arith.constant 0.000000e+00 : f32
      %26 = vector.broadcast %cst_23 : f32 to vector<8x1xf32>
      %c0_24 = arith.constant 0 : index
      %c0_25 = arith.constant 0 : index
      %27 = vector.load %arg7[%c0_24, %c0_25] : memref<8x1xf32, #tpu.memory_space<vmem>>, vector<8x1xf32>
      tpu.vector_store %arg7[%c0_24, %c0_25], %26 {strides = array<i32>} : memref<8x1xf32, #tpu.memory_space<vmem>>, vector<8x1xf32>,
      %cst_26 = arith.constant 0.000000e+00 : f32
      %28 = vector.broadcast %cst_26 : f32 to vector<128x1xf32>
      %c0_27 = arith.constant 0 : index
      %c0_28 = arith.constant 0 : index
      %29 = vector.load %arg8[%c0_27, %c0_28] : memref<128x1xf32, #tpu.memory_space<vmem>>, vector<128x1xf32>
      tpu.vector_store %arg8[%c0_27, %c0_28], %28 {strides = array<i32>} : memref<128x1xf32, #tpu.memory_space<vmem>>, vector<128x1xf32>,
    } else {
    }
    %c0 = arith.constant 0 : index
    %c0_1 = arith.constant 0 : index
    %3 = vector.load %arg3[%c0, %c0_1] : memref<8x128xf32, #tpu.memory_space<vmem>>, vector<8x128xf32>
    %c0_2 = arith.constant 0 : index
    %c0_3 = arith.constant 0 : index
    %4 = vector.load %arg4[%c0_2, %c0_3] : memref<128x128xf32, #tpu.memory_space<vmem>>, vector<128x128xf32>
    %c0_4 = arith.constant 0 : index
    %c0_5 = arith.constant 0 : index
    %5 = vector.load %arg6[%c0_4, %c0_5] : memref<8x128xf32, #tpu.memory_space<vmem>>, vector<8x128xf32>
    %cst = arith.constant dense<0.000000e+00> : vector<8x128xf32>
    %6 = tpu.matmul %3, %4, %cst {dimension_numbers = #tpu.dot_dimension_numbers<[1], [1], [0], [0], [0, 0, 1, 0], [], []>} : vector<8x128xf32>, vector<128x128xf32>, vector<8x128xf32> -> vector<8x128xf32>
    %7 = arith.addf %5, %6 : vector<8x128xf32>
    %c0_6 = arith.constant 0 : index
    %c0_7 = arith.constant 0 : index
    %8 = vector.load %arg6[%c0_6, %c0_7] : memref<8x128xf32, #tpu.memory_space<vmem>>, vector<8x128xf32>
    tpu.vector_store %arg6[%c0_6, %c0_7], %7 {strides = array<i32>} : memref<8x128xf32, #tpu.memory_space<vmem>>, vector<8x128xf32>,
    %c0_8 = arith.constant 0 : index
    %c0_9 = arith.constant 0 : index
    %9 = vector.load %arg7[%c0_8, %c0_9] : memref<8x1xf32, #tpu.memory_space<vmem>>, vector<8x1xf32>
    %10 = arith.mulf %3, %3 : vector<8x128xf32>
    %cst_10 = arith.constant dense<0.000000e+00> : vector<8xf32>
    %11 = vector.multi_reduction <add>, %10, %cst_10 [1] : vector<8x128xf32> to vector<8xf32>
    %12 = vector.shape_cast %11 : vector<8xf32> to vector<8x1xf32>
    %13 = arith.addf %9, %12 : vector<8x1xf32>
    %c0_11 = arith.constant 0 : index
    %c0_12 = arith.constant 0 : index
    %14 = vector.load %arg7[%c0_11, %c0_12] : memref<8x1xf32, #tpu.memory_space<vmem>>, vector<8x1xf32>
    tpu.vector_store %arg7[%c0_11, %c0_12], %13 {strides = array<i32>} : memref<8x1xf32, #tpu.memory_space<vmem>>, vector<8x1xf32>,
    %c0_13 = arith.constant 0 : index
    %c0_14 = arith.constant 0 : index
    %15 = vector.load %arg8[%c0_13, %c0_14] : memref<128x1xf32, #tpu.memory_space<vmem>>, vector<128x1xf32>
    %16 = arith.mulf %4, %4 : vector<128x128xf32>
    %cst_15 = arith.constant dense<0.000000e+00> : vector<128xf32>
    %17 = vector.multi_reduction <add>, %16, %cst_15 [1] : vector<128x128xf32> to vector<128xf32>
    %18 = vector.shape_cast %17 : vector<128xf32> to vector<128x1xf32>
    %19 = arith.addf %15, %18 : vector<128x1xf32>
    %c0_16 = arith.constant 0 : index
    %c0_17 = arith.constant 0 : index
    %20 = vector.load %arg8[%c0_16, %c0_17] : memref<128x1xf32, #tpu.memory_space<vmem>>, vector<128x1xf32>
    tpu.vector_store %arg8[%c0_16, %c0_17], %19 {strides = array<i32>} : memref<128x1xf32, #tpu.memory_space<vmem>>, vector<128x1xf32>,
    %c0_i32_18 = arith.constant 0 : i32
    %21 = arith.cmpi eq, %arg2, %c0_i32_18 : i32
    %22 = arith.extui %21 : i1 to i32
    %c0_i32_19 = arith.constant 0 : i32
    %23 = arith.cmpi ne, %22, %c0_i32_19 : i32
    scf.if %23 {
      %c0_20 = arith.constant 0 : index
      %c0_21 = arith.constant 0 : index
      %24 = vector.load %arg7[%c0_20, %c0_21] : memref<8x1xf32, #tpu.memory_space<vmem>>, vector<8x1xf32>
      %cst_22 = arith.constant 1.000000e-24 : f32
      %25 = vector.broadcast %cst_22 : f32 to vector<8x1xf32>
      %26 = arith.maximumf %24, %25 : vector<8x1xf32>
      %27 = math.rsqrt %26 : vector<8x1xf32>
      %c0_23 = arith.constant 0 : index
      %c0_24 = arith.constant 0 : index
      %28 = vector.load %arg8[%c0_23, %c0_24] : memref<128x1xf32, #tpu.memory_space<vmem>>, vector<128x1xf32>
      %cst_25 = arith.constant 1.000000e-24 : f32
      %29 = vector.broadcast %cst_25 : f32 to vector<128x1xf32>
      %30 = arith.maximumf %28, %29 : vector<128x1xf32>
      %31 = math.rsqrt %30 : vector<128x1xf32>
      %c0_26 = arith.constant 0 : index
      %c0_27 = arith.constant 0 : index
      %32 = vector.load %arg6[%c0_26, %c0_27] : memref<8x128xf32, #tpu.memory_space<vmem>>, vector<8x128xf32>
      %33 = vector.broadcast %27 : vector<8x1xf32> to vector<8x128xf32>
      %34 = arith.mulf %32, %33 : vector<8x128xf32>
      %35 = tpu.transpose %31, [1, 0] : vector<128x1xf32> -> vector<1x128xf32>
      %36 = vector.broadcast %35 : vector<1x128xf32> to vector<8x128xf32>
      %37 = arith.mulf %34, %36 : vector<8x128xf32>
      %c0_28 = arith.constant 0 : index
      %c0_29 = arith.constant 0 : index
      %38 = vector.load %arg5[%c0_28, %c0_29] : memref<8x128xf32, #tpu.memory_space<vmem>>, vector<8x128xf32>
      tpu.vector_store %arg5[%c0_28, %c0_29], %37 {strides = array<i32>} : memref<8x128xf32, #tpu.memory_space<vmem>>, vector<8x128xf32>,
    } else {
    }
    return
  }
  func.func @transform_0(%arg0: i32, %arg1: i32, %arg2: i32) -> (i32, i32) {
    %c0_i32 = arith.constant 0 : i32
    return %arg0, %arg2 : i32, i32
  }
  func.func @transform_1(%arg0: i32, %arg1: i32, %arg2: i32) -> (i32, i32) {
    %c0_i32 = arith.constant 0 : i32
    return %arg1, %arg2 : i32, i32
  }
  func.func @transform_2(%arg0: i32, %arg1: i32, %arg2: i32) -> (i32, i32) {
    %c0_i32 = arith.constant 0 : i32
    return %arg0, %arg1 : i32, i32
  }
}

</mosaic_0001>

<llo_original>
// kernel: arc_margin_product.1
$region0: #{arc_margin_product.1}
  #allocation0 [shape = 'u32[]', space=smem, size = 0x4, offset = 0x4, fixed_abs, tag = 'smem constant byte address 0x4 - core index']
  #allocation1 [shape = 'u32[144,128]{1,0:T(1,128)}', space=vmem, size = 0x12000, scoped, tag = 'internal scratch']
  #allocation2 [shape = 'f32[8,128]{1,0:T(8,128)}', space=vmem, size = 0x1000, scoped, tag = 'scratch operand']
  #allocation3 [shape = 'f32[8,1]{1,0:T(8,128)}', space=vmem, size = 0x1000, scoped, tag = 'scratch operand']
  #allocation4 [shape = 'f32[128,1]{1,0:T(8,128)}', space=vmem, size = 0x10000, scoped, tag = 'scratch operand']
  %s0 = inlined_call_operand.hbm [shape: f32[8,128], index: 0, kind: input, shape index: {}]
  %s1 = inlined_call_operand.hbm [shape: f32[256,128], index: 1, kind: input, shape index: {}]
  %s2 = inlined_call_operand.hbm [shape: f32[8,256], index: 2, kind: output, shape index: {}]
  %s3 = sld [smem:[#allocation0]]
  $region57: #{arc_margin_product.1} parent=0
    _
  %s5 = ssub.s32 1, %s3
  %s6 = scalar_select 0, %s5, %s3
  $region1: #{arc_margin_product.1} parent=0
    #allocation5 [shape = 'u8[4096]{0}', space=vmem, size = 0x1000, scoped, tag = 'input window, operand 0, single buffered']
    #allocation6 [shape = 's32[2]{0}', space=sflag, size = 0x8, scoped, tag = 'scoped memory for arc_margin_product.1']
    #allocation7 [shape = 's32[2]{0}', space=sflag, size = 0x8, scoped, tag = 'scoped memory for arc_margin_product.1']
    #allocation8 [shape = 'u8[131072]{0}', space=vmem, size = 0x20000, scoped, tag = 'input window, operand 1']
    #allocation9 [shape = 's32[2]{0}', space=sflag, size = 0x8, scoped, tag = 'scoped memory for arc_margin_product.1']
    #allocation10 [shape = 'u8[8192]{0}', space=vmem, size = 0x2000, scoped, tag = 'output window, operand 0']
    %7 = vsyncpa [#allocation6], 0
    %8 = vsyncpa [#allocation9], 0
    %s9 = scalar_lea.sflag [#allocation9], 1
    %10 = vsyncpa %s9, 0
    %11 = vsyncpa [#allocation7], 0
    %s12 = scalar_lea.sflag [#allocation7], 1
    %13 = vsyncpa %s12, 0
    loop: start=0, step=1, limit=4
    $region2: #{arc_margin_product.1} parent=1 // loop_pre_header
      _
    $region3: #{arc_margin_product.1} parent=1 // loop_header
      %s15 = sphi 0, %s19
      %p16 = scmp.ge.s32.totalorder %s15, 4
      %s22 = sphi 0, %s41
      %s23 = sphi 0, %s37
      %s24 = sphi 0, %s33
      %s25 = sphi 0, %s22
      %s26 = sphi 0, %s23
      %s27 = sphi 0, %s24
      %s28 = sphi 0, %s25
      %s29 = sphi 0, %s26
      %s30 = sphi 0, %s27
      %s46 = sphi 0, %s48
      %s49 = sphi 0, %s46
      %s50 = sphi 0, %s49
      %s66 = sphi 0, %s50
      %s74 = sphi 0, %s76
      %s77 = sphi 0, %s74
      %s78 = sphi 0, %s77
      %s94 = sphi 0, %s78
      %s102 = sphi 0, %s104
      %s105 = sphi 0, %s102
      %s106 = sphi 0, %s105
      %s122 = sphi 0, %s106
    $region4: #{arc_margin_product.1} parent=1 // loop_header_branch
      %18 = sbr.rel (%p16) target = $region8
    $region5: #{arc_margin_product.1} parent=1 // loop_body
      %s20 = ssub.s32 %s15, 1
      %s21 = ssub.s32 %s15, 2
      %s31 = sadd.s32 1, %s24
      %p32 = scmp.ge.s32.totalorder %s31, 1
      %s33 = scalar_select %p32, 0, %s31
      %s34 = sadd.s32 1, %s23
      %s35 = scalar_select %p32, %s34, %s23
      %p36 = scmp.ge.s32.totalorder %s35, 2
      %s37 = scalar_select %p36, 0, %s35
      %s38 = sadd.s32 1, %s22
      %s39 = scalar_select %p36, %s38, %s22
      %p40 = scmp.ge.s32.totalorder %s39, 1
      %s41 = scalar_select %p40, 0, %s39
      %s42 = ssub.s32 %s22, %s41
      %s43 = ssub.s32 %s24, %s33
      %s44 = sor.u32 %s42, %s43
      %p45 = scmp.eq.s32.totalorder %s44, 0
      %s47 = sadd.s32 %s46, 1
      %s48 = scalar_select %p45, %s46, %s47
      %p51 = pneg %p45
      %p52 = scmp.eq.s32.totalorder %s15, 1
      %p53 = por %p51, %p52
      %p54 = scmp.ne.s32.totalorder %s46, %s49
      %p55 = scmp.eq.s32.totalorder %s15, 0
      %p56 = por %p54, %p55
      %p57 = scmp.ne.s32.totalorder %s46, %s49
      %p58 = scmp.eq.s32.totalorder %s20, 1
      %p59 = por %p57, %p58
      %p60 = scmp.ne.s32.totalorder %s49, %s50
      %p61 = scmp.eq.s32.totalorder %s20, 0
      %p62 = por %p60, %p61
      %p63 = scmp.ne.s32.totalorder %s49, %s50
      %p64 = scmp.eq.s32.totalorder %s21, 1
      %p65 = por %p63, %p64
      %p67 = scmp.ne.s32.totalorder %s50, %s66
      %p68 = scmp.eq.s32.totalorder %s21, 0
      %p69 = por %p67, %p68
      %s70 = ssub.s32 %s23, %s37
      %s71 = ssub.s32 %s24, %s33
      %s72 = sor.u32 %s70, %s71
      %p73 = scmp.eq.s32.totalorder %s72, 0
      %s75 = sadd.s32 %s74, 1
      %s76 = scalar_select %p73, %s74, %s75
      %p79 = pneg %p73
      %p80 = scmp.eq.s32.totalorder %s15, 1
      %p81 = por %p79, %p80
      %p82 = scmp.ne.s32.totalorder %s74, %s77
      %p83 = scmp.eq.s32.totalorder %s15, 0
      %p84 = por %p82, %p83
      %p85 = scmp.ne.s32.totalorder %s74, %s77
      %p86 = scmp.eq.s32.totalorder %s20, 1
      %p87 = por %p85, %p86
      %p88 = scmp.ne.s32.totalorder %s77, %s78
      %p89 = scmp.eq.s32.totalorder %s20, 0
      %p90 = por %p88, %p89
      %p91 = scmp.ne.s32.totalorder %s77, %s78
      %p92 = scmp.eq.s32.totalorder %s21, 1
      %p93 = por %p91, %p92
      %p95 = scmp.ne.s32.totalorder %s78, %s94
      %p96 = scmp.eq.s32.totalorder %s21, 0
      %p97 = por %p95, %p96
      %s98 = ssub.s32 %s22, %s41
      %s99 = ssub.s32 %s23, %s37
      %s100 = sor.u32 %s98, %s99
      %p101 = scmp.eq.s32.totalorder %s100, 0
      %s103 = sadd.s32 %s102, 1
      %s104 = scalar_select %p101, %s102, %s103
      %p107 = pneg %p101
      %p108 = scmp.eq.s32.totalorder %s15, 1
      %p109 = por %p107, %p108
      %p110 = scmp.ne.s32.totalorder %s102, %s105
      %p111 = scmp.eq.s32.totalorder %s15, 0
      %p112 = por %p110, %p111
      %p113 = scmp.ne.s32.totalorder %s102, %s105
      %p114 = scmp.eq.s32.totalorder %s20, 1
      %p115 = por %p113, %p114
      %p116 = scmp.ne.s32.totalorder %s105, %s106
      %p117 = scmp.eq.s32.totalorder %s20, 0
      %p118 = por %p116, %p117
      %p119 = scmp.ne.s32.totalorder %s105, %s106
      %p120 = scmp.eq.s32.totalorder %s21, 1
      %p121 = por %p119, %p120
      %p123 = scmp.ne.s32.totalorder %s106, %s122
      %p124 = scmp.eq.s32.totalorder %s21, 0
      %p125 = por %p123, %p124
      %p126 = scmp.le.s32.totalorder 1, %s15
      %p127 = scmp.lt.s32.totalorder %s15, 3
      %p128 = pnand %p126, %p127
      %p129 = pneg %p128
      // Predicated region
      $region9: #{arc_margin_product.1} parent=5 // pred_check
        _
      $region10: #{arc_margin_product.1} parent=5 // pred_check_branch
        %131 = sbr.rel (%p128) target = $region12
      $region11: #{arc_margin_product.1} parent=5 // pred_region
        %s132 = ssub.s32 %s15, 1
        // Predicated region
        $region13: #{arc_margin_product.1} parent=11 // pred_check
          %p133 = pneg %p62
        $region14: #{arc_margin_product.1} parent=11 // pred_check_branch
          %135 = sbr.rel (%p133) target = $region16
        $region15: #{arc_margin_product.1} parent=11 // pred_region
          %s137 = ssub.s32 128, 128
          %138 = vsyncadd [#allocation6], %s137
          %s139 = sadd.s32 %s27, %s25
          %s140 = smul.addr %s139, 128
          %s141 = scalar_lea.hbm %s0, %s140
          %s143 = sshll.u32 [#allocation5], 4
          %s144 = int_to_ptr.vmem [resolvable:$true] %s143
          %146 = dma.hbm_to_vmem [thread:$0]  %s141, 128, %s144, [#allocation6]
        $region16: #{arc_margin_product.1} parent=11 // pred_fallthru
          _
      $region12: #{arc_margin_product.1} parent=5 // pred_fallthru
        _
      %p147 = scmp.lt.s32.totalorder %s15, 2
      // Predicated region
      $region17: #{arc_margin_product.1} parent=5 // pred_check
        %p148 = pneg %p147
      $region18: #{arc_margin_product.1} parent=5 // pred_check_branch
        %150 = sbr.rel (%p148) target = $region20
      $region19: #{arc_margin_product.1} parent=5 // pred_region
        // Predicated region
        $region21: #{arc_margin_product.1} parent=19 // pred_check
          %p151 = pneg %p84
        $region22: #{arc_margin_product.1} parent=19 // pred_check_branch
          %153 = sbr.rel (%p151) target = $region24
        $region23: #{arc_margin_product.1} parent=19 // pred_region
          %s154 = sand.u32 %s74, 1
          %s155 = scalar_lea.sflag [#allocation9], %s154
          %s156 = sand.u32 %s74, 1
          %s157 = smul.addr %s156, 128
          %s158 = scalar_lea.vmem [#allocation8], %s157
          %s159 = smul.u32 16, %s23
          %s161 = ssub.s32 2048, 2048
          %162 = vsyncadd %s155, %s161
          %s163 = sadd.s32 %s24, %s159
          %s164 = smul.addr %s163, 128
          %s165 = scalar_lea.hbm %s1, %s164
          %s166 = sshll.u32 %s158, 4
          %s167 = int_to_ptr.vmem [resolvable:$true] %s166
          %172 = dma.hbm_to_vmem [thread:$0]  %s165, 2048, %s167, %s155, 128, 128, 8
        $region24: #{arc_margin_product.1} parent=19 // pred_fallthru
          _
      $region20: #{arc_margin_product.1} parent=5 // pred_fallthru
        _
      %p173 = scmp.le.s32.totalorder 1, %s15
      %p174 = scmp.lt.s32.totalorder %s15, 3
      %p175 = pnand %p173, %p174
      %p176 = pneg %p175
      // Predicated region
      $region25: #{arc_margin_product.1} parent=5 // pred_check
        _
      $region26: #{arc_margin_product.1} parent=5 // pred_check_branch
        %178 = sbr.rel (%p175) target = $region28
      $region27: #{arc_margin_product.1} parent=5 // pred_region
        %s179 = ssub.s32 %s15, 1
        // Predicated region
        $region29: #{arc_margin_product.1} parent=27 // pred_check
          %p180 = pneg %p62
        $region30: #{arc_margin_product.1} parent=27 // pred_check_branch
          %182 = sbr.rel (%p180) target = $region32
        $region31: #{arc_margin_product.1} parent=27 // pred_region
          %183 = dma.done [#allocation6], 128
        $region32: #{arc_margin_product.1} parent=27 // pred_fallthru
          _
        %s184 = sand.u32 %s77, 1
        %s185 = scalar_lea.sflag [#allocation9], %s184
        %s186 = sand.u32 %s77, 1
        %s187 = smul.addr %s186, 128
        %s188 = scalar_lea.vmem [#allocation8], %s187
        // Predicated region
        $region33: #{arc_margin_product.1} parent=27 // pred_check
          %p189 = pneg %p90
        $region34: #{arc_margin_product.1} parent=27 // pred_check_branch
          %191 = sbr.rel (%p189) target = $region36
        $region35: #{arc_margin_product.1} parent=27 // pred_region
          %192 = dma.done %s185, 2048
        $region36: #{arc_margin_product.1} parent=27 // pred_fallthru
          _
        %p193 = pneg %p62
        %p194 = pneg %p59
        %s195 = sand.u32 %s77, 1
        %s196 = scalar_lea.sflag [#allocation9], %s195
        %s197 = sand.u32 %s77, 1
        %s198 = smul.addr %s197, 128
        %s199 = scalar_lea.vmem [#allocation8], %s198
        %p200 = pneg %p90
        %p201 = pneg %p87
        %p202 = pneg %p118
        %p203 = pneg %p115
        %s204 = sand.u32 %s105, 1
        %s205 = scalar_lea.sflag [#allocation7], %s204
        %s206 = sand.u32 %s105, 1
        %s207 = smul.addr %s206, 8
        %s208 = scalar_lea.vmem [#allocation10], %s207
        %s209 = smul.u32 16, %s26
        %p210 = scmp.eq.s32.totalorder %s27, 0
        // Predicated region
        $region37: #{arc_margin_product.1} parent=27 // pred_check
          %p211 = pneg %p210
        $region38: #{arc_margin_product.1} parent=27 // pred_check_branch
          %213 = sbr.rel (%p211) target = $region40
        $region39: #{arc_margin_product.1} parent=27 // pred_region
          %214 = vst [vmem:[#allocation2] sm:$0xff] 0.0
          %vm215 = vcmask 7168
          %216 = vst.msk [vmem:[#allocation3] sm:$0xff] %vm215, 0.0
          %217 = vst.msk [vmem:[#allocation4] sm:$0xff] %vm215, 0.0
          %218 = vst.msk [vmem:[#allocation4 + $0x8] sm:$0xff] %vm215, 0.0
          %219 = vst.msk [vmem:[#allocation4 + $0x10] sm:$0xff] %vm215, 0.0
          %220 = vst.msk [vmem:[#allocation4 + $0x18] sm:$0xff] %vm215, 0.0
          %221 = vst.msk [vmem:[#allocation4 + $0x20] sm:$0xff] %vm215, 0.0
          %222 = vst.msk [vmem:[#allocation4 + $0x28] sm:$0xff] %vm215, 0.0
          %223 = vst.msk [vmem:[#allocation4 + $0x30] sm:$0xff] %vm215, 0.0
          %224 = vst.msk [vmem:[#allocation4 + $0x38] sm:$0xff] %vm215, 0.0
          %225 = vst.msk [vmem:[#allocation4 + $0x40] sm:$0xff] %vm215, 0.0
          %226 = vst.msk [vmem:[#allocation4 + $0x48] sm:$0xff] %vm215, 0.0
          %227 = vst.msk [vmem:[#allocation4 + $0x50] sm:$0xff] %vm215, 0.0
          %228 = vst.msk [vmem:[#allocation4 + $0x58] sm:$0xff] %vm215, 0.0
          %229 = vst.msk [vmem:[#allocation4 + $0x60] sm:$0xff] %vm215, 0.0
          %230 = vst.msk [vmem:[#allocation4 + $0x68] sm:$0xff] %vm215, 0.0
          %231 = vst.msk [vmem:[#allocation4 + $0x70] sm:$0xff] %vm215, 0.0
          %232 = vst.msk [vmem:[#allocation4 + $0x78] sm:$0xff] %vm215, 0.0
        $region40: #{arc_margin_product.1} parent=27 // pred_fallthru
          _
        %v233 = vld [vmem:[#allocation5] sm:$0xff]
        %v234 = vld [vmem:[%s188] sm:$0xff]
        %v235 = vld [vmem:[%s188 + $0x8] sm:$0xff]
        %v236 = vld [vmem:[%s188 + $0x10] sm:$0xff]
        %v237 = vld [vmem:[%s188 + $0x18] sm:$0xff]
        %v238 = vld [vmem:[%s188 + $0x20] sm:$0xff]
        %v239 = vld [vmem:[%s188 + $0x28] sm:$0xff]
        %v240 = vld [vmem:[%s188 + $0x30] sm:$0xff]
        %v241 = vld [vmem:[%s188 + $0x38] sm:$0xff]
        %v242 = vld [vmem:[%s188 + $0x40] sm:$0xff]
        %v243 = vld [vmem:[%s188 + $0x48] sm:$0xff]
        %v244 = vld [vmem:[%s188 + $0x50] sm:$0xff]
        %v245 = vld [vmem:[%s188 + $0x58] sm:$0xff]
        %v246 = vld [vmem:[%s188 + $0x60] sm:$0xff]
        %v247 = vld [vmem:[%s188 + $0x68] sm:$0xff]
        %v248 = vld [vmem:[%s188 + $0x70] sm:$0xff]
        %v249 = vld [vmem:[%s188 + $0x78] sm:$0xff]
        %v250 = vld [vmem:[#allocation2] sm:$0xff]
        %251 = vmatprep.subr.mxu0 0.0
        %252 = vmatpush1.xpose.msra.mxu0 %v234
        %253 = vmatprep.subr.mxu0 0.0
        %254 = vmatpush1.xpose.msra.mxu0 %v235
        %255 = vmatprep.subr.mxu0 0.0
        %256 = vmatpush1.xpose.msra.mxu0 %v236
        %257 = vmatprep.subr.mxu0 0.0
        %258 = vmatpush1.xpose.msra.mxu0 %v237
        %259 = vmatprep.subr.mxu0 0.0
        %260 = vmatpush1.xpose.msra.mxu0 %v238
        %261 = vmatprep.subr.mxu0 0.0
        %262 = vmatpush1.xpose.msra.mxu0 %v239
        %263 = vmatprep.subr.mxu0 0.0
        %264 = vmatpush1.xpose.msra.mxu0 %v240
        %265 = vmatprep.subr.mxu0 0.0
        %266 = vmatpush1.xpose.msra.mxu0 %v241
        %267 = vmatprep.subr.mxu0 0.0
        %268 = vmatpush1.xpose.msra.mxu0 %v242
        %269 = vmatprep.subr.mxu0 0.0
        %270 = vmatpush1.xpose.msra.mxu0 %v243
        %271 = vmatprep.subr.mxu0 0.0
        %272 = vmatpush1.xpose.msra.mxu0 %v244
        %273 = vmatprep.subr.mxu0 0.0
        %274 = vmatpush1.xpose.msra.mxu0 %v245
        %275 = vmatprep.subr.mxu0 0.0
        %276 = vmatpush1.xpose.msra.mxu0 %v246
        %277 = vmatprep.subr.mxu0 0.0
        %278 = vmatpush1.xpose.msra.mxu0 %v247
        %279 = vmatprep.subr.mxu0 0.0
        %280 = vmatpush1.xpose.msra.mxu0 %v248
        %281 = vmatprep.subr.mxu0 0.0
        %282 = vmatpush1.xpose.msra.mxu0 %v249
        %283 = vmatprep.subr.mxu0 0.0
        %284 = vmatpush1.xpose.msra.mxu0 0.0
        %285 = vmatprep.subr.mxu0 0.0
        %286 = vmatpush1.xpose.msra.mxu0 0.0
        %287 = vmatprep.subr.mxu0 0.0
        %288 = vmatpush1.xpose.msra.mxu0 0.0
        %289 = vmatprep.subr.mxu0 0.0
        %290 = vmatpush1.xpose.msra.mxu0 0.0
        %291 = vmatprep.subr.mxu0 0.0
        %292 = vmatpush1.xpose.msra.mxu0 0.0
        %293 = vmatprep.subr.mxu0 0.0
        %294 = vmatpush1.xpose.msra.mxu0 0.0
        %295 = vmatprep.subr.mxu0 0.0
        %296 = vmatpush1.xpose.msra.mxu0 0.0
        %297 = vmatprep.subr.mxu0 0.0
        %298 = vmatpush1.xpose.msra.mxu0 0.0
        %299 = vmatprep.subr.mxu0 0.0
        %300 = vmatpush1.xpose.msra.mxu0 0.0
        %301 = vmatprep.subr.mxu0 0.0
        %302 = vmatpush1.xpose.msra.mxu0 0.0
        %303 = vmatprep.subr.mxu0 0.0
        %304 = vmatpush1.xpose.msra.mxu0 0.0
        %305 = vmatprep.subr.mxu0 0.0
        %306 = vmatpush1.xpose.msra.mxu0 0.0
        %307 = vmatprep.subr.mxu0 0.0
        %308 = vmatpush1.xpose.msra.mxu0 0.0
        %309 = vmatprep.subr.mxu0 0.0
        %310 = vmatpush1.xpose.msra.mxu0 0.0
        %311 = vmatprep.subr.mxu0 0.0
        %312 = vmatpush1.xpose.msra.mxu0 0.0
        %313 = vmatprep.subr.mxu0 0.0
        %314 = vmatpush1.xpose.msra.mxu0 0.0
        %315 = vmatprep.mubr.f32.mxu0 0.0
        %316 = vmatmul.mubr.f32.gmra.mrb[0].mxu0 %v233
        %v317 = vpop.f32.mrb[0].mxu0
        %v318 = vadd.f32 0.0, %v317
        %v319 = vpop.f32.mrb[0].mxu0
        %320 = vdwg.mxu0
        %v321 = vadd.f32 %v250, %v318
        %322 = vst [vmem:[#allocation2] sm:$0xff] %v321
        %v323 = vld [vmem:[#allocation3] sm:$0xff]
        %v324 = vmul.f32 %v233, %v233
        %325 = vadd.xlane.f32.xlu0 %v324
        %v326 = vpop.xlane.xlu0 %325
        %v327 = vadd.f32 %v323, %v326
        %vm328 = vcmask 7168
        %329 = vst.msk [vmem:[#allocation3] sm:$0xff] %vm328, %v327
        %v330 = vld [vmem:[#allocation4] sm:$0xff]
        %v331 = vld [vmem:[#allocation4 + $0x8] sm:$0xff]
        %v332 = vld [vmem:[#allocation4 + $0x10] sm:$0xff]
        %v333 = vld [vmem:[#allocation4 + $0x18] sm:$0xff]
        %v334 = vld [vmem:[#allocation4 + $0x20] sm:$0xff]
        %v335 = vld [vmem:[#allocation4 + $0x28] sm:$0xff]
        %v336 = vld [vmem:[#allocation4 + $0x30] sm:$0xff]
        %v337 = vld [vmem:[#allocation4 + $0x38] sm:$0xff]
        %v338 = vld [vmem:[#allocation4 + $0x40] sm:$0xff]
        %v339 = vld [vmem:[#allocation4 + $0x48] sm:$0xff]
        %v340 = vld [vmem:[#allocation4 + $0x50] sm:$0xff]
        %v341 = vld [vmem:[#allocation4 + $0x58] sm:$0xff]
        %v342 = vld [vmem:[#allocation4 + $0x60] sm:$0xff]
        %v343 = vld [vmem:[#allocation4 + $0x68] sm:$0xff]
        %v344 = vld [vmem:[#allocation4 + $0x70] sm:$0xff]
        %v345 = vld [vmem:[#allocation4 + $0x78] sm:$0xff]
        %v346 = vmul.f32 %v234, %v234
        %v347 = vmul.f32 %v235, %v235
        %v348 = vmul.f32 %v236, %v236
        %v349 = vmul.f32 %v237, %v237
        %v350 = vmul.f32 %v238, %v238
        %v351 = vmul.f32 %v239, %v239
        %v352 = vmul.f32 %v240, %v240
        %v353 = vmul.f32 %v241, %v241
        %v354 = vmul.f32 %v242, %v242
        %v355 = vmul.f32 %v243, %v243
        %v356 = vmul.f32 %v244, %v244
        %v357 = vmul.f32 %v245, %v245
        %v358 = vmul.f32 %v246, %v246
        %v359 = vmul.f32 %v247, %v247
        %v360 = vmul.f32 %v248, %v248
        %v361 = vmul.f32 %v249, %v249
        %362 = vadd.xlane.f32.xlu0 %v346
        %v363 = vpop.xlane.xlu0 %362
        %364 = vadd.xlane.f32.xlu0 %v347
        %v365 = vpop.xlane.xlu0 %364
        %366 = vadd.xlane.f32.xlu0 %v348
        %v367 = vpop.xlane.xlu0 %366
        %368 = vadd.xlane.f32.xlu0 %v349
        %v369 = vpop.xlane.xlu0 %368
        %370 = vadd.xlane.f32.xlu0 %v350
        %v371 = vpop.xlane.xlu0 %370
        %372 = vadd.xlane.f32.xlu0 %v351
        %v373 = vpop.xlane.xlu0 %372
        %374 = vadd.xlane.f32.xlu0 %v352
        %v375 = vpop.xlane.xlu0 %374
        %376 = vadd.xlane.f32.xlu0 %v353
        %v377 = vpop.xlane.xlu0 %376
        %378 = vadd.xlane.f32.xlu0 %v354
        %v379 = vpop.xlane.xlu0 %378
        %380 = vadd.xlane.f32.xlu0 %v355
        %v381 = vpop.xlane.xlu0 %380
        %382 = vadd.xlane.f32.xlu0 %v356
        %v383 = vpop.xlane.xlu0 %382
        %384 = vadd.xlane.f32.xlu0 %v357
        %v385 = vpop.xlane.xlu0 %384
        %386 = vadd.xlane.f32.xlu0 %v358
        %v387 = vpop.xlane.xlu0 %386
        %388 = vadd.xlane.f32.xlu0 %v359
        %v389 = vpop.xlane.xlu0 %388
        %390 = vadd.xlane.f32.xlu0 %v360
        %v391 = vpop.xlane.xlu0 %390
        %392 = vadd.xlane.f32.xlu0 %v361
        %v393 = vpop.xlane.xlu0 %392
        %v394 = vadd.f32 %v330, %v363
        %v395 = vadd.f32 %v331, %v365
        %v396 = vadd.f32 %v332, %v367
        %v397 = vadd.f32 %v333, %v369
        %v398 = vadd.f32 %v334, %v371
        %v399 = vadd.f32 %v335, %v373
        %v400 = vadd.f32 %v336, %v375
        %v401 = vadd.f32 %v337, %v377
        %v402 = vadd.f32 %v338, %v379
        %v403 = vadd.f32 %v339, %v381
        %v404 = vadd.f32 %v340, %v383
        %v405 = vadd.f32 %v341, %v385
        %v406 = vadd.f32 %v342, %v387
        %v407 = vadd.f32 %v343, %v389
        %v408 = vadd.f32 %v344, %v391
        %v409 = vadd.f32 %v345, %v393
        %410 = vst.msk [vmem:[#allocation4] sm:$0xff] %vm328, %v394
        %411 = vst.msk [vmem:[#allocation4 + $0x8] sm:$0xff] %vm328, %v395
        %412 = vst.msk [vmem:[#allocation4 + $0x10] sm:$0xff] %vm328, %v396
        %413 = vst.msk [vmem:[#allocation4 + $0x18] sm:$0xff] %vm328, %v397
        %414 = vst.msk [vmem:[#allocation4 + $0x20] sm:$0xff] %vm328, %v398
        %415 = vst.msk [vmem:[#allocation4 + $0x28] sm:$0xff] %vm328, %v399
        %416 = vst.msk [vmem:[#allocation4 + $0x30] sm:$0xff] %vm328, %v400
        %417 = vst.msk [vmem:[#allocation4 + $0x38] sm:$0xff] %vm328, %v401
        %418 = vst.msk [vmem:[#allocation4 + $0x40] sm:$0xff] %vm328, %v402
        %419 = vst.msk [vmem:[#allocation4 + $0x48] sm:$0xff] %vm328, %v403
        %420 = vst.msk [vmem:[#allocation4 + $0x50] sm:$0xff] %vm328, %v404
        %421 = vst.msk [vmem:[#allocation4 + $0x58] sm:$0xff] %vm328, %v405
        %422 = vst.msk [vmem:[#allocation4 + $0x60] sm:$0xff] %vm328, %v406
        %423 = vst.msk [vmem:[#allocation4 + $0x68] sm:$0xff] %vm328, %v407
        %424 = vst.msk [vmem:[#allocation4 + $0x70] sm:$0xff] %vm328, %v408
        %425 = vst.msk [vmem:[#allocation4 + $0x78] sm:$0xff] %vm328, %v409
        // Predicated region
        $region41: #{arc_margin_product.1} parent=27 // pred_check
          %p426 = pneg %p210
        $region42: #{arc_margin_product.1} parent=27 // pred_check_branch
          %428 = sbr.rel (%p426) target = $region44
        $region43: #{arc_margin_product.1} parent=27 // pred_region
          %v429 = vld [vmem:[#allocation3] sm:$0xff]
          %v430 = vmax.f32 %v429, 1e-24
          %v431 = vrsqrt.pop %v430
          %v432 = vld [vmem:[#allocation4] sm:$0xff]
          %v433 = vld [vmem:[#allocation4 + $0x8] sm:$0xff]
          %v434 = vld [vmem:[#allocation4 + $0x10] sm:$0xff]
          %v435 = vld [vmem:[#allocation4 + $0x18] sm:$0xff]
          %v436 = vld [vmem:[#allocation4 + $0x20] sm:$0xff]
          %v437 = vld [vmem:[#allocation4 + $0x28] sm:$0xff]
          %v438 = vld [vmem:[#allocation4 + $0x30] sm:$0xff]
          %v439 = vld [vmem:[#allocation4 + $0x38] sm:$0xff]
          %v440 = vld [vmem:[#allocation4 + $0x40] sm:$0xff]
          %v441 = vld [vmem:[#allocation4 + $0x48] sm:$0xff]
          %v442 = vld [vmem:[#allocation4 + $0x50] sm:$0xff]
          %v443 = vld [vmem:[#allocation4 + $0x58] sm:$0xff]
          %v444 = vld [vmem:[#allocation4 + $0x60] sm:$0xff]
          %v445 = vld [vmem:[#allocation4 + $0x68] sm:$0xff]
          %v446 = vld [vmem:[#allocation4 + $0x70] sm:$0xff]
          %v447 = vld [vmem:[#allocation4 + $0x78] sm:$0xff]
          %v448 = vmax.f32 %v432, 1e-24
          %v449 = vmax.f32 %v433, 1e-24
          %v450 = vmax.f32 %v434, 1e-24
          %v451 = vmax.f32 %v435, 1e-24
          %v452 = vmax.f32 %v436, 1e-24
          %v453 = vmax.f32 %v437, 1e-24
          %v454 = vmax.f32 %v438, 1e-24
          %v455 = vmax.f32 %v439, 1e-24
          %v456 = vmax.f32 %v440, 1e-24
          %v457 = vmax.f32 %v441, 1e-24
          %v458 = vmax.f32 %v442, 1e-24
          %v459 = vmax.f32 %v443, 1e-24
          %v460 = vmax.f32 %v444, 1e-24
          %v461 = vmax.f32 %v445, 1e-24
          %v462 = vmax.f32 %v446, 1e-24
          %v463 = vmax.f32 %v447, 1e-24
          %v464 = vrsqrt.pop %v448
          %v465 = vrsqrt.pop %v449
          %v466 = vrsqrt.pop %v450
          %v467 = vrsqrt.pop %v451
          %v468 = vrsqrt.pop %v452
          %v469 = vrsqrt.pop %v453
          %v470 = vrsqrt.pop %v454
          %v471 = vrsqrt.pop %v455
          %v472 = vrsqrt.pop %v456
          %v473 = vrsqrt.pop %v457
          %v474 = vrsqrt.pop %v458
          %v475 = vrsqrt.pop %v459
          %v476 = vrsqrt.pop %v460
          %v477 = vrsqrt.pop %v461
          %v478 = vrsqrt.pop %v462
          %v479 = vrsqrt.pop %v463
          %v480 = vld [vmem:[#allocation2] sm:$0xff]
          %482 = vset.pattern.permute.xlu0 0
          %483 = vperm.xlu0 %482, %v431
          %v484 = vpop.permute.xlu0 %483
          %v486 = vmul.f32 %v480, %v484
          %487 = vxpose.xlu0.b32.start [1/16] %v464, 128
          %488 = vxpose.xlu0.b32.cont [2/16] %v465, 128
          %489 = vxpose.xlu0.b32.cont [3/16] %v466, 128
          %490 = vxpose.xlu0.b32.cont [4/16] %v467, 128
          %491 = vxpose.xlu0.b32.cont [5/16] %v468, 128
          %492 = vxpose.xlu0.b32.cont [6/16] %v469, 128
          %493 = vxpose.xlu0.b32.cont [7/16] %v470, 128
          %494 = vxpose.xlu0.b32.cont [8/16] %v471, 128
          %495 = vxpose.xlu0.b32.cont [9/16] %v472, 128
          %496 = vxpose.xlu0.b32.cont [10/16] %v473, 128
          %497 = vxpose.xlu0.b32.cont [11/16] %v474, 128
          %498 = vxpose.xlu0.b32.cont [12/16] %v475, 128
          %499 = vxpose.xlu0.b32.cont [13/16] %v476, 128
          %500 = vxpose.xlu0.b32.cont [14/16] %v477, 128
          %501 = vxpose.xlu0.b32.cont [15/16] %v478, 128
          %502 = vxpose.xlu0.b32.end [16/16] %v479, 128
          %v503 = vpop.trf.xlu0
          %v504 = vpop.trf.xlu0
          %v505 = vpop.trf.xlu0
          %v506 = vpop.trf.xlu0
          %v507 = vpop.trf.xlu0
          %v508 = vpop.trf.xlu0
          %v509 = vpop.trf.xlu0
          %v510 = vpop.trf.xlu0
          %v511 = vpop.trf.xlu0
          %v512 = vpop.trf.xlu0
          %v513 = vpop.trf.xlu0
          %v514 = vpop.trf.xlu0
          %v515 = vpop.trf.xlu0
          %v516 = vpop.trf.xlu0
          %v517 = vpop.trf.xlu0
          %v518 = vpop.trf.xlu0
          %v519 = vlaneseq
          %v520 = vshrl.u32 %v519, 7
          %v521 = vsub.s32 0, %v520
          %v522 = vrot.slane %v503, %v521
          %v523 = vmul.f32 %v486, %v522
          %524 = vst [vmem:[%s208] sm:$0xff] %v523
        $region44: #{arc_margin_product.1} parent=27 // pred_fallthru
          _
        %s525 = sand.u32 %s105, 1
        %s526 = scalar_lea.sflag [#allocation7], %s525
        %s527 = sand.u32 %s105, 1
        %s528 = smul.addr %s527, 8
        %s529 = scalar_lea.vmem [#allocation10], %s528
        // Predicated region
        $region45: #{arc_margin_product.1} parent=27 // pred_check
          %p530 = pneg %p115
        $region46: #{arc_margin_product.1} parent=27 // pred_check_branch
          %532 = sbr.rel (%p530) target = $region48
        $region47: #{arc_margin_product.1} parent=27 // pred_region
          %s534 = ssub.s32 128, 128
          %535 = vsyncadd %s526, %s534
          %s536 = smul.addr %s25, 2
          %s537 = sadd.s32 %s26, %s536
          %s538 = smul.addr %s537, 128
          %s539 = scalar_lea.hbm %s2, %s538
          %s541 = sshll.u32 %s529, 4
          %s542 = int_to_ptr.vmem [resolvable:$true] %s541
          %544 = dma.vmem_to_hbm [thread:$0]  %s542, 128, %s539, %s526
        $region48: #{arc_margin_product.1} parent=27 // pred_fallthru
          _
      $region28: #{arc_margin_product.1} parent=5 // pred_fallthru
        _
      %p545 = scmp.le.s32.totalorder 2, %s15
      // Predicated region
      $region49: #{arc_margin_product.1} parent=5 // pred_check
        %p546 = pneg %p545
      $region50: #{arc_margin_product.1} parent=5 // pred_check_branch
        %548 = sbr.rel (%p546) target = $region52
      $region51: #{arc_margin_product.1} parent=5 // pred_region
        %s549 = ssub.s32 %s15, 2
        // Predicated region
        $region53: #{arc_margin_product.1} parent=51 // pred_check
          %p550 = pneg %p121
        $region54: #{arc_margin_product.1} parent=51 // pred_check_branch
          %552 = sbr.rel (%p550) target = $region56
        $region55: #{arc_margin_product.1} parent=51 // pred_region
          %s553 = sand.u32 %s106, 1
          %s554 = scalar_lea.sflag [#allocation7], %s553
          %s555 = sand.u32 %s106, 1
          %s556 = smul.addr %s555, 8
          %s557 = scalar_lea.vmem [#allocation10], %s556
          %558 = dma.done %s554, 128
        $region56: #{arc_margin_product.1} parent=51 // pred_fallthru
          _
      $region52: #{arc_margin_product.1} parent=5 // pred_fallthru
        _
    $region6: #{arc_margin_product.1} parent=1 // loop_footer
      %s19 = sadd.s32 1, %s15
    $region7: #{arc_margin_product.1} parent=1 // loop_footer_branch
      %14 = sbr.rel target = $region3
    $region8: #{arc_margin_product.1} parent=1 // loop_exit
      _
    %559 = vsyncpa [#allocation6], 1
    %s560 = scalar_lea.sflag [#allocation6], 1
    %561 = vsyncpa %s560, 1
    %562 = vsyncpa [#allocation9], 1
    %s563 = scalar_lea.sflag [#allocation9], 1
    %564 = vsyncpa %s563, 1
    %565 = vsyncpa [#allocation7], 1
    %s566 = scalar_lea.sflag [#allocation7], 1
    %567 = vsyncpa %s566, 1

</llo_original>
